<compile_context>
chip_gen: v7x
topology: tpu7x:2x2x1
jax: 0.10.0
libtpu: 0.0.40
codegen_flags: <defaults>
</compile_context>

<pallas_src>
import functools

import jax
import jax.numpy as jnp
from jax import lax
from jax.experimental import pallas as pl
from jax.experimental.pallas import tpu as pltpu

BN_EPS = 1e-5
_NUM_PASSES = 4  # 3 statistics passes (one per BN layer) + 1 output pass


def _mm(w_ref, a, matmul_dtype):
    # bf16 MXU matmul with f32 accumulation; keeps dot -> BN dataflow reshape-free.
    return jnp.dot(w_ref[...], a.astype(matmul_dtype),
                   preferred_element_type=jnp.float32)


def _mlp_single_tile_kernel(x_ref, w1_ref, w2_ref, w3_ref, wo_ref, bo_ref,  # inputs
                            o_ref,                                          # output
                            *, batch, tile_batch, padded, matmul_dtype):
    """Whole (padded) batch fits in one lane tile: fully fused forward in one grid step."""
    inv_b = 1.0 / float(batch)

    if padded:
        lane = lax.broadcasted_iota(jnp.int32, (1, tile_batch), 1)
        valid = lane < batch                       # (1, TB) bool; keep padding out of BN stats
    else:
        valid = None

    def bn_relu(h):
        hm = h if valid is None else jnp.where(valid, h, 0.0)
        mu = jnp.sum(hm, axis=1, keepdims=True) * inv_b
        var = jnp.maximum(jnp.sum(hm * hm, axis=1, keepdims=True) * inv_b - mu * mu, 0.0)
        return jnp.maximum((h - mu) * lax.rsqrt(var + BN_EPS), 0.0)

    a1 = bn_relu(_mm(w1_ref, x_ref[...], matmul_dtype))
    a2 = bn_relu(_mm(w2_ref, a1, matmul_dtype))
    a3 = bn_relu(_mm(w3_ref, a2, matmul_dtype))
    o_ref[...] = _mm(wo_ref, a3, matmul_dtype) + bo_ref[...]


def _mlp_multipass_kernel(x_ref, w1_ref, w2_ref, w3_ref, wo_ref, bo_ref,   # inputs
                          o_ref,                                            # output
                          ssum_ref, ssq_ref,                                # persistent scratch
                          *, batch, tile_batch, padded, matmul_dtype):
    p = pl.program_id(0)   # pass index (0..3), outer / sequential
    t = pl.program_id(1)   # batch-tile index, inner / sequential

    inv_b = 1.0 / float(batch)

    # Zero the per-layer statistics accumulators exactly once, at the first grid step.
    @pl.when((p == 0) & (t == 0))
    def _init():
        ssum_ref[...] = jnp.zeros_like(ssum_ref)
        ssq_ref[...] = jnp.zeros_like(ssq_ref)

    # Finalize layer l's statistics once per pass (at tile 0):
    #   ssum[l] <- batch mean,  ssq[l] <- 1/sqrt(biased_var + eps)
    # so per-tile BN is a single fused (h - mu) * inv_std (no per-tile rsqrt/mean recompute).
    def finalize(layer):
        mu = ssum_ref[layer] * inv_b
        var = jnp.maximum(ssq_ref[layer] * inv_b - mu * mu, 0.0)
        ssum_ref[layer] = mu
        ssq_ref[layer] = lax.rsqrt(var + BN_EPS)

    @pl.when((t == 0) & (p == 1))
    def _fin0():
        finalize(0)

    @pl.when((t == 0) & (p == 2))
    def _fin1():
        finalize(1)

    @pl.when((t == 0) & (p == 3))
    def _fin2():
        finalize(2)

    # Validity mask over the lane (= batch) axis of this tile, so padded columns never
    # contaminate the BN statistics.  Statically skipped when the batch divides the tile.
    if padded:
        lane = lax.broadcasted_iota(jnp.int32, (1, tile_batch), 1)
        valid = lane < (batch - t * tile_batch)
    else:
        valid = None

    def accum(layer, h):
        hm = h if valid is None else jnp.where(valid, h, 0.0)
        ssum_ref[layer] = ssum_ref[layer] + jnp.sum(hm, axis=1, keepdims=True)
        ssq_ref[layer] = ssq_ref[layer] + jnp.sum(hm * hm, axis=1, keepdims=True)

    def bn_relu(h, layer):
        # Stats for `layer` were finalized at the start of an earlier (or this) pass.
        return jnp.maximum((h - ssum_ref[layer]) * ssq_ref[layer], 0.0)

    # Layer 1 is (re)computed every pass (tiny matmul); fc biases are dropped (cancelled by BN).
    h1 = _mm(w1_ref, x_ref[...], matmul_dtype)                          # (H, TB) f32

    @pl.when(p == 0)
    def _pass0():
        accum(0, h1)

    @pl.when(p >= 1)
    def _pass_ge1():
        a1 = bn_relu(h1, 0)
        h2 = _mm(w2_ref, a1, matmul_dtype)

        @pl.when(p == 1)
        def _pass1():
            accum(1, h2)

        @pl.when(p >= 2)
        def _pass_ge2():
            a2 = bn_relu(h2, 1)
            h3 = _mm(w3_ref, a2, matmul_dtype)

            @pl.when(p == 2)
            def _pass2():
                accum(2, h3)

            @pl.when(p == 3)
            def _pass3():
                a3 = bn_relu(h3, 2)
                # Output linear with its explicit [0.2, -0.2] bias; (2, TB) lane-dense store.
                o_ref[...] = _mm(wo_ref, a3, matmul_dtype) + bo_ref[...]


@functools.partial(jax.jit, static_argnames=("block_batch", "matmul_dtype"))
def mlp_forward(x, params, block_batch=512, matmul_dtype=jnp.bfloat16):
    """x: (B, input_window_size) float32 -> (B, 2*predicted_step) float32."""
    assert block_batch % 128 == 0, "batch tile must be a multiple of the 128-lane width"
    B, in_dim = x.shape
    H = params["w1"].shape[0]
    out_dim = params["wo"].shape[0]

    # Batch tile (lane axis): clamp to the padded batch for small batches.
    tb = min(block_batch, ((B + 127) // 128) * 128)
    n_tiles = (B + tb - 1) // tb
    b_pad = n_tiles * tb

    # Transposed, lane-dense, bf16 input: (in_dim, B_pad) with batch on lanes.
    xt = x.T.astype(matmul_dtype)
    if b_pad != B:
        xt = jnp.pad(xt, ((0, 0), (0, b_pad - B)))

    w1 = params["w1"].astype(matmul_dtype)     # (H, in_dim)   PyTorch (out, in) layout
    w2 = params["w2"].astype(matmul_dtype)     # (H, H)
    w3 = params["w3"].astype(matmul_dtype)     # (H, H)
    wo = params["wo"].astype(matmul_dtype)     # (out_dim, H)
    bo = params["bo"].astype(jnp.float32)      # (out_dim, 1)

    common = dict(batch=B, tile_batch=tb, padded=(b_pad != B), matmul_dtype=matmul_dtype)

    if n_tiles == 1:
        # Fast path: whole padded batch in one tile -> single grid step, fully fused.
        kernel = functools.partial(_mlp_single_tile_kernel, **common)
        out_t = pl.pallas_call(
            kernel,
            out_shape=jax.ShapeDtypeStruct((out_dim, b_pad), jnp.float32),
            grid_spec=pltpu.PrefetchScalarGridSpec(
                num_scalar_prefetch=0,
                grid=(1,),
                in_specs=[
                    pl.BlockSpec((in_dim, tb), lambda i: (0, 0)),
                    pl.BlockSpec(w1.shape, lambda i: (0, 0)),
                    pl.BlockSpec(w2.shape, lambda i: (0, 0)),
                    pl.BlockSpec(w3.shape, lambda i: (0, 0)),
                    pl.BlockSpec(wo.shape, lambda i: (0, 0)),
                    pl.BlockSpec(bo.shape, lambda i: (0, 0)),
                ],
                out_specs=pl.BlockSpec((out_dim, tb), lambda i: (0, 0)),
            ),
            compiler_params=pltpu.CompilerParams(
                dimension_semantics=("arbitrary",),
                vmem_limit_bytes=32 * 1024 * 1024,
            ),
        )(xt, w1, w2, w3, wo, bo)
    else:
        # Streaming path: 4 sequential passes over the batch tiles; BN stats in VMEM scratch.
        kernel = functools.partial(_mlp_multipass_kernel, **common)

        def resident(shape):  # whole array, fetched once, stays in VMEM across the grid
            return pl.BlockSpec(shape, lambda p, t: (0, 0))

        out_t = pl.pallas_call(
            kernel,
            out_shape=jax.ShapeDtypeStruct((out_dim, b_pad), jnp.float32),
            grid_spec=pltpu.PrefetchScalarGridSpec(
                num_scalar_prefetch=0,
                grid=(_NUM_PASSES, n_tiles),               # pass axis outer, batch tiles inner
                in_specs=[
                    pl.BlockSpec((in_dim, tb), lambda p, t: (0, t)),   # streamed x tile
                    resident(w1.shape),
                    resident(w2.shape),
                    resident(w3.shape),
                    resident(wo.shape),
                    resident(bo.shape),
                ],
                out_specs=pl.BlockSpec((out_dim, tb), lambda p, t: (0, t)),
                scratch_shapes=[
                    pltpu.VMEM((3, H, 1), jnp.float32),    # per-layer sum -> mean
                    pltpu.VMEM((3, H, 1), jnp.float32),    # per-layer sum-of-squares -> inv_std
                ],
            ),
            compiler_params=pltpu.CompilerParams(
                # Both axes sequential: BN statistics accumulate in shared scratch across tiles.
                dimension_semantics=("arbitrary", "arbitrary"),
                vmem_limit_bytes=32 * 1024 * 1024,
            ),
        )(xt, w1, w2, w3, wo, bo)

    return out_t[:, :B].T


def init_params(key, num_neurons=64, input_window_size=24, predicted_step=1):
    """Parameters matching the PyTorch module, in PyTorch's (out_features, in_features) layout.
    Per-layer Linear biases and BN gamma/beta are omitted: with training-mode BN the biases are
    exactly cancelled by the batch-mean subtraction and gamma=1/beta=0 is the default init, so
    they cannot affect the forward output.  The output bias is the module's explicit [0.2, -0.2]."""
    def linear_w(k, fan_in, fan_out):
        bound = 1.0 / (fan_in ** 0.5)
        return jax.random.uniform(k, (fan_out, fan_in), jnp.float32, -bound, bound)

    k1, k2, k3, ko = jax.random.split(key, 4)
    out_dim = 2 * predicted_step
    return {
        "w1": linear_w(k1, input_window_size, num_neurons),
        "w2": linear_w(k2, num_neurons, num_neurons),
        "w3": linear_w(k3, num_neurons, num_neurons),
        "wo": linear_w(ko, num_neurons, out_dim),
        "bo": jnp.array([0.2, -0.2], jnp.float32).reshape(out_dim, 1),
    }


def mlp_reference(x, params, matmul_dtype=jnp.bfloat16):
    """Pure-JAX reference with the same math / dtype choices, for validation."""
    def bn_relu(h):
        mu = jnp.mean(h, axis=1, keepdims=True)
        var = jnp.maximum(jnp.mean(h * h, axis=1, keepdims=True) - mu * mu, 0.0)
        return jnp.maximum((h - mu) * lax.rsqrt(var + BN_EPS), 0.0)

    def mm(w, a):
        return jnp.dot(w.astype(matmul_dtype), a.astype(matmul_dtype),
                       preferred_element_type=jnp.float32)

    a = x.T
    a = bn_relu(mm(params["w1"], a))
    a = bn_relu(mm(params["w2"], a))
    a = bn_relu(mm(params["w3"], a))
    out = mm(params["wo"], a) + params["bo"]
    return out.T


if __name__ == "__main__":
    key = jax.random.PRNGKey(0)
    kx, kp = jax.random.split(key)

    # Small shapes consistent with the module; B=200 exercises lane padding.
    B, INPUT_WINDOW, NUM_NEURONS, PRED_STEP = 200, 24, 64, 1
    x = jax.random.normal(kx, (B, INPUT_WINDOW), jnp.float32)
    params = init_params(kp, NUM_NEURONS, INPUT_WINDOW, PRED_STEP)
    ref = mlp_reference(x, params)

    # Path 1: single-tile fused kernel (B=200 -> one 256-wide lane tile, masked padding).
    out_single = mlp_forward(x, params, block_batch=512)
    jax.block_until_ready(out_single)
    assert out_single.shape == (B, 2 * PRED_STEP)
    err1 = float(jnp.max(jnp.abs(out_single - ref)))
    assert err1 < 1e-2, f"single-tile kernel mismatch: max|diff| = {err1}"

    # Path 2: multi-pass streaming kernel (two 128-wide tiles, partial/masked last tile).
    out_multi = mlp_forward(x, params, block_batch=128)
    jax.block_until_ready(out_multi)
    assert out_multi.shape == (B, 2 * PRED_STEP)
    err2 = float(jnp.max(jnp.abs(out_multi - ref)))
    assert err2 < 1e-2, f"multi-pass kernel mismatch: max|diff| = {err2}"

    print("KERNEL_OK")
</pallas_src>

<mosaic_0001>
module attributes {stable_mosaic.version = 11 : i64} {
  func.func @_mlp_single_tile_kernel(%arg0: i32, %arg1: memref<24x256xbf16, #tpu.memory_space<vmem>>, %arg2: memref<64x24xbf16, #tpu.memory_space<vmem>>, %arg3: memref<64x64xbf16, #tpu.memory_space<vmem>>, %arg4: memref<64x64xbf16, #tpu.memory_space<vmem>>, %arg5: memref<2x64xbf16, #tpu.memory_space<vmem>>, %arg6: memref<2x1xf32, #tpu.memory_space<vmem>>, %arg7: memref<2x256xf32, #tpu.memory_space<vmem>>) attributes {dimension_semantics = [#tpu.dimension_semantics<arbitrary>], iteration_bounds = array<i64: 1>, scalar_prefetch = 0 : i64, scratch_operands = 0 : i64, tpu.core_type = #tpu.core_type<tc>, window_params = [{pipeline_mode = #tpu.pipeline_mode<synchronous>, transform_indices = @transform_0, window_bounds = array<i64: 24, 256>}, {pipeline_mode = #tpu.pipeline_mode<synchronous>, transform_indices = @transform_1, window_bounds = array<i64: 64, 24>}, {pipeline_mode = #tpu.pipeline_mode<synchronous>, transform_indices = @transform_2, window_bounds = array<i64: 64, 64>}, {pipeline_mode = #tpu.pipeline_mode<synchronous>, transform_indices = @transform_3, window_bounds = array<i64: 64, 64>}, {pipeline_mode = #tpu.pipeline_mode<synchronous>, transform_indices = @transform_4, window_bounds = array<i64: 2, 64>}, {pipeline_mode = #tpu.pipeline_mode<synchronous>, transform_indices = @transform_5, window_bounds = array<i64: 2, 1>}, {pipeline_mode = #tpu.pipeline_mode<synchronous>, transform_indices = @transform_6, window_bounds = array<i64: 2, 256>}]} {
    %0 = tpu.iota {dimensions = array<i32: 1>} : vector<1x256xi32>
    %c200_i32 = arith.constant 200 : i32
    %1 = vector.broadcast %c200_i32 : i32 to vector<1x256xi32>
    %2 = arith.cmpi slt, %0, %1 : vector<1x256xi32>
    %c0 = arith.constant 0 : index
    %c0_0 = arith.constant 0 : index
    %3 = vector.load %arg1[%c0, %c0_0] : memref<24x256xbf16, #tpu.memory_space<vmem>>, vector<24x256xbf16>
    %c0_1 = arith.constant 0 : index
    %c0_2 = arith.constant 0 : index
    %4 = vector.load %arg2[%c0_1, %c0_2] : memref<64x24xbf16, #tpu.memory_space<vmem>>, vector<64x24xbf16>
    %cst = arith.constant dense<0.000000e+00> : vector<64x256xf32>
    %5 = tpu.matmul %4, %3, %cst {dimension_numbers = #tpu.dot_dimension_numbers<[1], [0], [0], [1], [0, 0, 1, 1], [], []>} : vector<64x24xbf16>, vector<24x256xbf16>, vector<64x256xf32> -> vector<64x256xf32>
    %cst_3 = arith.constant 0.000000e+00 : f32
    %6 = vector.shape_cast %2 : vector<1x256xi1> to vector<1x256xi1>
    %7 = vector.broadcast %6 : vector<1x256xi1> to vector<64x256xi1>
    %8 = vector.broadcast %cst_3 : f32 to vector<64x256xf32>
    %9 = arith.select %7, %5, %8 : vector<64x256xi1>, vector<64x256xf32>
    %cst_4 = arith.constant dense<0.000000e+00> : vector<64xf32>
    %10 = vector.multi_reduction <add>, %9, %cst_4 [1] : vector<64x256xf32> to vector<64xf32>
    %11 = vector.shape_cast %10 : vector<64xf32> to vector<64x1xf32>
    %cst_5 = arith.constant 5.000000e-03 : f32
    %12 = vector.broadcast %cst_5 : f32 to vector<64x1xf32>
    %13 = arith.mulf %11, %12 : vector<64x1xf32>
    %14 = arith.mulf %9, %9 : vector<64x256xf32>
    %cst_6 = arith.constant dense<0.000000e+00> : vector<64xf32>
    %15 = vector.multi_reduction <add>, %14, %cst_6 [1] : vector<64x256xf32> to vector<64xf32>
    %16 = vector.shape_cast %15 : vector<64xf32> to vector<64x1xf32>
    %cst_7 = arith.constant 5.000000e-03 : f32
    %17 = vector.broadcast %cst_7 : f32 to vector<64x1xf32>
    %18 = arith.mulf %16, %17 : vector<64x1xf32>
    %19 = arith.mulf %13, %13 : vector<64x1xf32>
    %20 = arith.subf %18, %19 : vector<64x1xf32>
    %cst_8 = arith.constant 0.000000e+00 : f32
    %21 = vector.broadcast %cst_8 : f32 to vector<64x1xf32>
    %22 = arith.maximumf %20, %21 : vector<64x1xf32>
    %23 = vector.broadcast %13 : vector<64x1xf32> to vector<64x256xf32>
    %24 = arith.subf %5, %23 : vector<64x256xf32>
    %cst_9 = arith.constant 9.99999974E-6 : f32
    %25 = vector.broadcast %cst_9 : f32 to vector<64x1xf32>
    %26 = arith.addf %22, %25 : vector<64x1xf32>
    %27 = math.rsqrt %26 : vector<64x1xf32>
    %28 = vector.broadcast %27 : vector<64x1xf32> to vector<64x256xf32>
    %29 = arith.mulf %24, %28 : vector<64x256xf32>
    %cst_10 = arith.constant 0.000000e+00 : f32
    %30 = vector.broadcast %cst_10 : f32 to vector<64x256xf32>
    %31 = arith.maximumf %29, %30 : vector<64x256xf32>
    %c0_11 = arith.constant 0 : index
    %c0_12 = arith.constant 0 : index
    %32 = vector.load %arg3[%c0_11, %c0_12] : memref<64x64xbf16, #tpu.memory_space<vmem>>, vector<64x64xbf16>
    %33 = arith.truncf %31 : vector<64x256xf32> to vector<64x256xbf16>
    %cst_13 = arith.constant dense<0.000000e+00> : vector<64x256xf32>
    %34 = tpu.matmul %32, %33, %cst_13 {dimension_numbers = #tpu.dot_dimension_numbers<[1], [0], [0], [1], [0, 0, 1, 1], [], []>} : vector<64x64xbf16>, vector<64x256xbf16>, vector<64x256xf32> -> vector<64x256xf32>
    %cst_14 = arith.constant 0.000000e+00 : f32
    %35 = vector.shape_cast %2 : vector<1x256xi1> to vector<1x256xi1>
    %36 = vector.broadcast %35 : vector<1x256xi1> to vector<64x256xi1>
    %37 = vector.broadcast %cst_14 : f32 to vector<64x256xf32>
    %38 = arith.select %36, %34, %37 : vector<64x256xi1>, vector<64x256xf32>
    %cst_15 = arith.constant dense<0.000000e+00> : vector<64xf32>
    %39 = vector.multi_reduction <add>, %38, %cst_15 [1] : vector<64x256xf32> to vector<64xf32>
    %40 = vector.shape_cast %39 : vector<64xf32> to vector<64x1xf32>
    %cst_16 = arith.constant 5.000000e-03 : f32
    %41 = vector.broadcast %cst_16 : f32 to vector<64x1xf32>
    %42 = arith.mulf %40, %41 : vector<64x1xf32>
    %43 = arith.mulf %38, %38 : vector<64x256xf32>
    %cst_17 = arith.constant dense<0.000000e+00> : vector<64xf32>
    %44 = vector.multi_reduction <add>, %43, %cst_17 [1] : vector<64x256xf32> to vector<64xf32>
    %45 = vector.shape_cast %44 : vector<64xf32> to vector<64x1xf32>
    %cst_18 = arith.constant 5.000000e-03 : f32
    %46 = vector.broadcast %cst_18 : f32 to vector<64x1xf32>
    %47 = arith.mulf %45, %46 : vector<64x1xf32>
    %48 = arith.mulf %42, %42 : vector<64x1xf32>
    %49 = arith.subf %47, %48 : vector<64x1xf32>
    %cst_19 = arith.constant 0.000000e+00 : f32
    %50 = vector.broadcast %cst_19 : f32 to vector<64x1xf32>
    %51 = arith.maximumf %49, %50 : vector<64x1xf32>
    %52 = vector.broadcast %42 : vector<64x1xf32> to vector<64x256xf32>
    %53 = arith.subf %34, %52 : vector<64x256xf32>
    %cst_20 = arith.constant 9.99999974E-6 : f32
    %54 = vector.broadcast %cst_20 : f32 to vector<64x1xf32>
    %55 = arith.addf %51, %54 : vector<64x1xf32>
    %56 = math.rsqrt %55 : vector<64x1xf32>
    %57 = vector.broadcast %56 : vector<64x1xf32> to vector<64x256xf32>
    %58 = arith.mulf %53, %57 : vector<64x256xf32>
    %cst_21 = arith.constant 0.000000e+00 : f32
    %59 = vector.broadcast %cst_21 : f32 to vector<64x256xf32>
    %60 = arith.maximumf %58, %59 : vector<64x256xf32>
    %c0_22 = arith.constant 0 : index
    %c0_23 = arith.constant 0 : index
    %61 = vector.load %arg4[%c0_22, %c0_23] : memref<64x64xbf16, #tpu.memory_space<vmem>>, vector<64x64xbf16>
    %62 = arith.truncf %60 : vector<64x256xf32> to vector<64x256xbf16>
    %cst_24 = arith.constant dense<0.000000e+00> : vector<64x256xf32>
    %63 = tpu.matmul %61, %62, %cst_24 {dimension_numbers = #tpu.dot_dimension_numbers<[1], [0], [0], [1], [0, 0, 1, 1], [], []>} : vector<64x64xbf16>, vector<64x256xbf16>, vector<64x256xf32> -> vector<64x256xf32>
    %cst_25 = arith.constant 0.000000e+00 : f32
    %64 = vector.shape_cast %2 : vector<1x256xi1> to vector<1x256xi1>
    %65 = vector.broadcast %64 : vector<1x256xi1> to vector<64x256xi1>
    %66 = vector.broadcast %cst_25 : f32 to vector<64x256xf32>
    %67 = arith.select %65, %63, %66 : vector<64x256xi1>, vector<64x256xf32>
    %cst_26 = arith.constant dense<0.000000e+00> : vector<64xf32>
    %68 = vector.multi_reduction <add>, %67, %cst_26 [1] : vector<64x256xf32> to vector<64xf32>
    %69 = vector.shape_cast %68 : vector<64xf32> to vector<64x1xf32>
    %cst_27 = arith.constant 5.000000e-03 : f32
    %70 = vector.broadcast %cst_27 : f32 to vector<64x1xf32>
    %71 = arith.mulf %69, %70 : vector<64x1xf32>
    %72 = arith.mulf %67, %67 : vector<64x256xf32>
    %cst_28 = arith.constant dense<0.000000e+00> : vector<64xf32>
    %73 = vector.multi_reduction <add>, %72, %cst_28 [1] : vector<64x256xf32> to vector<64xf32>
    %74 = vector.shape_cast %73 : vector<64xf32> to vector<64x1xf32>
    %cst_29 = arith.constant 5.000000e-03 : f32
    %75 = vector.broadcast %cst_29 : f32 to vector<64x1xf32>
    %76 = arith.mulf %74, %75 : vector<64x1xf32>
    %77 = arith.mulf %71, %71 : vector<64x1xf32>
    %78 = arith.subf %76, %77 : vector<64x1xf32>
    %cst_30 = arith.constant 0.000000e+00 : f32
    %79 = vector.broadcast %cst_30 : f32 to vector<64x1xf32>
    %80 = arith.maximumf %78, %79 : vector<64x1xf32>
    %81 = vector.broadcast %71 : vector<64x1xf32> to vector<64x256xf32>
    %82 = arith.subf %63, %81 : vector<64x256xf32>
    %cst_31 = arith.constant 9.99999974E-6 : f32
    %83 = vector.broadcast %cst_31 : f32 to vector<64x1xf32>
    %84 = arith.addf %80, %83 : vector<64x1xf32>
    %85 = math.rsqrt %84 : vector<64x1xf32>
    %86 = vector.broadcast %85 : vector<64x1xf32> to vector<64x256xf32>
    %87 = arith.mulf %82, %86 : vector<64x256xf32>
    %cst_32 = arith.constant 0.000000e+00 : f32
    %88 = vector.broadcast %cst_32 : f32 to vector<64x256xf32>
    %89 = arith.maximumf %87, %88 : vector<64x256xf32>
    %c0_33 = arith.constant 0 : index
    %c0_34 = arith.constant 0 : index
    %90 = vector.load %arg5[%c0_33, %c0_34] : memref<2x64xbf16, #tpu.memory_space<vmem>>, vector<2x64xbf16>
    %91 = arith.truncf %89 : vector<64x256xf32> to vector<64x256xbf16>
    %cst_35 = arith.constant dense<0.000000e+00> : vector<2x256xf32>
    %92 = tpu.matmul %90, %91, %cst_35 {dimension_numbers = #tpu.dot_dimension_numbers<[1], [0], [0], [1], [0, 0, 1, 1], [], []>} : vector<2x64xbf16>, vector<64x256xbf16>, vector<2x256xf32> -> vector<2x256xf32>
    %c0_36 = arith.constant 0 : index
    %c0_37 = arith.constant 0 : index
    %93 = vector.load %arg6[%c0_36, %c0_37] : memref<2x1xf32, #tpu.memory_space<vmem>>, vector<2x1xf32>
    %94 = vector.broadcast %93 : vector<2x1xf32> to vector<2x256xf32>
    %95 = arith.addf %92, %94 : vector<2x256xf32>
    %c0_38 = arith.constant 0 : index
    %c0_39 = arith.constant 0 : index
    %96 = vector.load %arg7[%c0_38, %c0_39] : memref<2x256xf32, #tpu.memory_space<vmem>>, vector<2x256xf32>
    tpu.vector_store %arg7[%c0_38, %c0_39], %95 {strides = array<i32>} : memref<2x256xf32, #tpu.memory_space<vmem>>, vector<2x256xf32>,
    return
  }
  func.func @transform_0(%arg0: i32) -> (i32, i32) {
    %c0_i32 = arith.constant 0 : i32
    %c0_i32_0 = arith.constant 0 : i32
    %c0_i32_1 = arith.constant 0 : i32
    return %c0_i32, %c0_i32_0 : i32, i32
  }
  func.func @transform_1(%arg0: i32) -> (i32, i32) {
    %c0_i32 = arith.constant 0 : i32
    %c0_i32_0 = arith.constant 0 : i32
    %c0_i32_1 = arith.constant 0 : i32
    return %c0_i32, %c0_i32_0 : i32, i32
  }
  func.func @transform_2(%arg0: i32) -> (i32, i32) {
    %c0_i32 = arith.constant 0 : i32
    %c0_i32_0 = arith.constant 0 : i32
    %c0_i32_1 = arith.constant 0 : i32
    return %c0_i32, %c0_i32_0 : i32, i32
  }
  func.func @transform_3(%arg0: i32) -> (i32, i32) {
    %c0_i32 = arith.constant 0 : i32
    %c0_i32_0 = arith.constant 0 : i32
    %c0_i32_1 = arith.constant 0 : i32
    return %c0_i32, %c0_i32_0 : i32, i32
  }
  func.func @transform_4(%arg0: i32) -> (i32, i32) {
    %c0_i32 = arith.constant 0 : i32
    %c0_i32_0 = arith.constant 0 : i32
    %c0_i32_1 = arith.constant 0 : i32
    return %c0_i32, %c0_i32_0 : i32, i32
  }
  func.func @transform_5(%arg0: i32) -> (i32, i32) {
    %c0_i32 = arith.constant 0 : i32
    %c0_i32_0 = arith.constant 0 : i32
    %c0_i32_1 = arith.constant 0 : i32
    return %c0_i32, %c0_i32_0 : i32, i32
  }
  func.func @transform_6(%arg0: i32) -> (i32, i32) {
    %c0_i32 = arith.constant 0 : i32
    %c0_i32_0 = arith.constant 0 : i32
    %c0_i32_1 = arith.constant 0 : i32
    return %c0_i32, %c0_i32_0 : i32, i32
  }
}

</mosaic_0001>

<llo_original>
// kernel: mlp_forward.1
$region0: #{mlp_forward.1}
  #allocation0 [shape = 'u32[]', space=smem, size = 0x4, offset = 0x4, fixed_abs, tag = 'smem constant byte address 0x4 - core index']
  #allocation1 [shape = 'u32[144,128]{1,0:T(1,128)}', space=vmem, size = 0x12000, scoped, tag = 'internal scratch']
  %s0 = inlined_call_operand.vmem [shape: bf16[24,256], index: 0, kind: input, shape index: {}]
  %s1 = inlined_call_operand.vmem [shape: bf16[64,24], index: 1, kind: input, shape index: {}]
  %s2 = inlined_call_operand.vmem [shape: bf16[64,64], index: 2, kind: input, shape index: {}]
  %s3 = inlined_call_operand.vmem [shape: bf16[64,64], index: 3, kind: input, shape index: {}]
  %s4 = inlined_call_operand.vmem [shape: bf16[2,64], index: 4, kind: input, shape index: {}]
  %s5 = inlined_call_operand.vmem [shape: f32[2,1], index: 5, kind: input, shape index: {}]
  %s6 = inlined_call_operand.vmem [shape: f32[2,256], index: 6, kind: output, shape index: {}]
  %s7 = sld [smem:[#allocation0]]
  $region34: #{mlp_forward.1} parent=0
    _
  %s9 = ssub.s32 1, %s7
  %s10 = scalar_select 0, %s9, %s7
  // Predicated region
  $region2: #{mlp_forward.1} parent=0 // pred_check
    _
  $region3: #{mlp_forward.1} parent=0 // pred_check_branch
    %12 = sbr.rel (0) target = $region5
  $region4: #{mlp_forward.1} parent=0 // pred_region
    _
  $region5: #{mlp_forward.1} parent=0 // pred_fallthru
    _
  // Predicated region
  $region6: #{mlp_forward.1} parent=0 // pred_check
    _
  $region7: #{mlp_forward.1} parent=0 // pred_check_branch
    %14 = sbr.rel (0) target = $region9
  $region8: #{mlp_forward.1} parent=0 // pred_region
    _
  $region9: #{mlp_forward.1} parent=0 // pred_fallthru
    _
  // Predicated region
  $region10: #{mlp_forward.1} parent=0 // pred_check
    _
  $region11: #{mlp_forward.1} parent=0 // pred_check_branch
    %16 = sbr.rel (0) target = $region13
  $region12: #{mlp_forward.1} parent=0 // pred_region
    _
  $region13: #{mlp_forward.1} parent=0 // pred_fallthru
    _
  // Predicated region
  $region14: #{mlp_forward.1} parent=0 // pred_check
    _
  $region15: #{mlp_forward.1} parent=0 // pred_check_branch
    %18 = sbr.rel (0) target = $region17
  $region16: #{mlp_forward.1} parent=0 // pred_region
    _
  $region17: #{mlp_forward.1} parent=0 // pred_fallthru
    _
  // Predicated region
  $region18: #{mlp_forward.1} parent=0 // pred_check
    _
  $region19: #{mlp_forward.1} parent=0 // pred_check_branch
    %20 = sbr.rel (0) target = $region21
  $region20: #{mlp_forward.1} parent=0 // pred_region
    _
  $region21: #{mlp_forward.1} parent=0 // pred_fallthru
    _
  // Predicated region
  $region22: #{mlp_forward.1} parent=0 // pred_check
    _
  $region23: #{mlp_forward.1} parent=0 // pred_check_branch
    %22 = sbr.rel (0) target = $region25
  $region24: #{mlp_forward.1} parent=0 // pred_region
    _
  $region25: #{mlp_forward.1} parent=0 // pred_fallthru
    _
  %v24 = vlaneseq
  %v25 = vand.u32 %v24, 127
  %v26 = vadd.s32 %v25, 128
  %vm27 = vcmp.lt.s32.totalorder %v25, 200
  %vm28 = vcmp.lt.s32.totalorder %v26, 200
  %v29 = vld [vmem:[%s0] sm:$0xff]
  %v30 = vld [vmem:[%s0 + $0x8] sm:$0xff]
  %v31 = vld [vmem:[%s0 + $0x10] sm:$0xff]
  %v32 = vld [vmem:[%s1] sm:$0xf]
  %v33 = vld [vmem:[%s1 + $0x4] sm:$0xf]
  %v34 = vld [vmem:[%s1 + $0x8] sm:$0xf]
  %v35 = vld [vmem:[%s1 + $0xc] sm:$0xf]
  %v36 = vld [vmem:[%s1 + $0x10] sm:$0xf]
  %v37 = vld [vmem:[%s1 + $0x14] sm:$0xf]
  %v38 = vld [vmem:[%s1 + $0x18] sm:$0xf]
  %v39 = vld [vmem:[%s1 + $0x1c] sm:$0xf]
  %v48 = vunpack.c.l.b16 %v32
  %v49 = vunpack.c.l.b16 %v33
  %v50 = vunpack.c.l.b16 %v34
  %v51 = vunpack.c.l.b16 %v35
  %v52 = vunpack.c.l.b16 %v36
  %v53 = vunpack.c.l.b16 %v37
  %v54 = vunpack.c.l.b16 %v38
  %v55 = vunpack.c.l.b16 %v39
  %v56 = vpack.c.b16 %v49, %v48
  %v57 = vpack.c.b16 %v51, %v50
  %v58 = vpack.c.b16 %v53, %v52
  %v59 = vpack.c.b16 %v55, %v54
  %v63 = vunpack.c.l.b16 %v29
  %v64 = vunpack.c.h.b16 %v29
  %v65 = vunpack.c.l.b16 %v30
  %v66 = vunpack.c.h.b16 %v30
  %v67 = vunpack.c.l.b16 %v31
  %v68 = vunpack.c.h.b16 %v31
  %v69 = vpack.c.b16 %v65, %v63
  %v70 = vpack.c.b16 %v66, %v64
  %v71 = vpack.c.b16 %v67, %v67
  %v72 = vpack.c.b16 %v68, %v68
  %vm75 = vcmask 195584
  %v77 = vsel %vm75, %v56, 0
  %v80 = vsel %vm75, %v57, 0
  %v83 = vsel %vm75, %v58, 0
  %v86 = vsel %vm75, %v59, 0
  %vm88 = vcmask 1043456
  %v90 = vsel %vm88, %v71, 0
  %v93 = vsel %vm88, %v72, 0
  %95 = vmatprep.subr.bf16.mxu0 %v70
  %96 = vmatpush1.bf16.msra.mxu0 %v69
  %97 = vmatprep.subr.bf16.mxu0 %v93
  %98 = vmatpush1.bf16.msra.mxu0 %v90
  %99 = vmatprep.subr.bf16.mxu0 0
  %100 = vmatpush1.bf16.msra.mxu0 0
  %101 = vmatprep.subr.bf16.mxu0 0
  %102 = vmatpush1.bf16.msra.mxu0 0
  %103 = vmatprep.subr.bf16.mxu0 0
  %104 = vmatpush1.bf16.msra.mxu0 0
  %105 = vmatprep.subr.bf16.mxu0 0
  %106 = vmatpush1.bf16.msra.mxu0 0
  %107 = vmatprep.subr.bf16.mxu0 0
  %108 = vmatpush1.bf16.msra.mxu0 0
  %109 = vmatprep.subr.bf16.mxu0 0
  %110 = vmatpush1.bf16.msra.mxu0 0
  %111 = vmatprep.subr.bf16.mxu0 0
  %112 = vmatpush1.bf16.msra.mxu0 0
  %113 = vmatprep.subr.bf16.mxu0 0
  %114 = vmatpush1.bf16.msra.mxu0 0
  %115 = vmatprep.subr.bf16.mxu0 0
  %116 = vmatpush1.bf16.msra.mxu0 0
  %117 = vmatprep.subr.bf16.mxu0 0
  %118 = vmatpush1.bf16.msra.mxu0 0
  %119 = vmatprep.subr.bf16.mxu0 0
  %120 = vmatpush1.bf16.msra.mxu0 0
  %121 = vmatprep.subr.bf16.mxu0 0
  %122 = vmatpush1.bf16.msra.mxu0 0
  %123 = vmatprep.subr.bf16.mxu0 0
  %124 = vmatpush1.bf16.msra.mxu0 0
  %125 = vmatprep.subr.bf16.mxu0 0
  %126 = vmatpush1.bf16.msra.mxu0 0
  %127 = vmatprep.mubr.bf16.mxu0 0
  %128 = vmatmul.mubr.bf16.gmra.mrb[0].mxu0 %v77
  %v129 = vpop.f32.mrb[0].mxu0
  %v130 = vadd.f32 0.0, %v129
  %v131 = vpop.f32.mrb[0].mxu0
  %v132 = vadd.f32 0.0, %v131
  %v133 = vpop.f32.mrb[0].mxu0
  %v134 = vadd.f32 0.0, %v133
  %v135 = vpop.f32.mrb[0].mxu0
  %v136 = vadd.f32 0.0, %v135
  %137 = vmatprep.mubr.bf16.mxu0 0
  %138 = vmatmul.mubr.bf16.gmra.mrb[0].mxu0 %v80
  %v139 = vpop.f32.mrb[0].mxu0
  %v140 = vadd.f32 0.0, %v139
  %v141 = vpop.f32.mrb[0].mxu0
  %v142 = vadd.f32 0.0, %v141
  %v143 = vpop.f32.mrb[0].mxu0
  %v144 = vadd.f32 0.0, %v143
  %v145 = vpop.f32.mrb[0].mxu0
  %v146 = vadd.f32 0.0, %v145
  %147 = vmatprep.mubr.bf16.mxu0 0
  %148 = vmatmul.mubr.bf16.gmra.mrb[0].mxu0 %v83
  %v149 = vpop.f32.mrb[0].mxu0
  %v150 = vadd.f32 0.0, %v149
  %v151 = vpop.f32.mrb[0].mxu0
  %v152 = vadd.f32 0.0, %v151
  %v153 = vpop.f32.mrb[0].mxu0
  %v154 = vadd.f32 0.0, %v153
  %v155 = vpop.f32.mrb[0].mxu0
  %v156 = vadd.f32 0.0, %v155
  %157 = vmatprep.mubr.bf16.mxu0 0
  %158 = vmatmul.mubr.bf16.gmra.mrb[0].mxu0 %v86
  %v159 = vpop.f32.mrb[0].mxu0
  %v160 = vadd.f32 0.0, %v159
  %v161 = vpop.f32.mrb[0].mxu0
  %v162 = vadd.f32 0.0, %v161
  %v163 = vpop.f32.mrb[0].mxu0
  %v164 = vadd.f32 0.0, %v163
  %v165 = vpop.f32.mrb[0].mxu0
  %v166 = vadd.f32 0.0, %v165
  %167 = vdwg.mxu0
  %v168 = vsel %vm27, 1, 0
  %v169 = vsel %vm28, 1, 0
  %vm170 = vcmp.eq.s32.totalorder %v168, 1
  %vm171 = vcmp.eq.s32.totalorder %v169, 1
  %v172 = vsel %vm170, %v130, 0.0
  %v173 = vsel %vm171, %v132, 0.0
  %v174 = vsel %vm170, %v134, 0.0
  %v175 = vsel %vm171, %v136, 0.0
  %v176 = vsel %vm170, %v140, 0.0
  %v177 = vsel %vm171, %v142, 0.0
  %v178 = vsel %vm170, %v144, 0.0
  %v179 = vsel %vm171, %v146, 0.0
  %v180 = vsel %vm170, %v150, 0.0
  %v181 = vsel %vm171, %v152, 0.0
  %v182 = vsel %vm170, %v154, 0.0
  %v183 = vsel %vm171, %v156, 0.0
  %v184 = vsel %vm170, %v160, 0.0
  %v185 = vsel %vm171, %v162, 0.0
  %v186 = vsel %vm170, %v164, 0.0
  %v187 = vsel %vm171, %v166, 0.0
  %v188 = vadd.f32 %v172, %v173
  %189 = vadd.xlane.f32.xlu0 %v188
  %v190 = vpop.xlane.xlu0 %189
  %v191 = vadd.f32 %v174, %v175
  %192 = vadd.xlane.f32.xlu0 %v191
  %v193 = vpop.xlane.xlu0 %192
  %v194 = vadd.f32 %v176, %v177
  %195 = vadd.xlane.f32.xlu0 %v194
  %v196 = vpop.xlane.xlu0 %195
  %v197 = vadd.f32 %v178, %v179
  %198 = vadd.xlane.f32.xlu0 %v197
  %v199 = vpop.xlane.xlu0 %198
  %v200 = vadd.f32 %v180, %v181
  %201 = vadd.xlane.f32.xlu0 %v200
  %v202 = vpop.xlane.xlu0 %201
  %v203 = vadd.f32 %v182, %v183
  %204 = vadd.xlane.f32.xlu0 %v203
  %v205 = vpop.xlane.xlu0 %204
  %v206 = vadd.f32 %v184, %v185
  %207 = vadd.xlane.f32.xlu0 %v206
  %v208 = vpop.xlane.xlu0 %207
  %v209 = vadd.f32 %v186, %v187
  %210 = vadd.xlane.f32.xlu0 %v209
  %v211 = vpop.xlane.xlu0 %210
  %v212 = vmul.f32 %v190, 0.005
  %v213 = vmul.f32 %v193, 0.005
  %v214 = vmul.f32 %v196, 0.005
  %v215 = vmul.f32 %v199, 0.005
  %v216 = vmul.f32 %v202, 0.005
  %v217 = vmul.f32 %v205, 0.005
  %v218 = vmul.f32 %v208, 0.005
  %v219 = vmul.f32 %v211, 0.005
  %v220 = vmul.f32 %v172, %v172
  %v221 = vmul.f32 %v173, %v173
  %v222 = vmul.f32 %v174, %v174
  %v223 = vmul.f32 %v175, %v175
  %v224 = vmul.f32 %v176, %v176
  %v225 = vmul.f32 %v177, %v177
  %v226 = vmul.f32 %v178, %v178
  %v227 = vmul.f32 %v179, %v179
  %v228 = vmul.f32 %v180, %v180
  %v229 = vmul.f32 %v181, %v181
  %v230 = vmul.f32 %v182, %v182
  %v231 = vmul.f32 %v183, %v183
  %v232 = vmul.f32 %v184, %v184
  %v233 = vmul.f32 %v185, %v185
  %v234 = vmul.f32 %v186, %v186
  %v235 = vmul.f32 %v187, %v187
  %v236 = vadd.f32 %v220, %v221
  %237 = vadd.xlane.f32.xlu0 %v236
  %v238 = vpop.xlane.xlu0 %237
  %v239 = vadd.f32 %v222, %v223
  %240 = vadd.xlane.f32.xlu0 %v239
  %v241 = vpop.xlane.xlu0 %240
  %v242 = vadd.f32 %v224, %v225
  %243 = vadd.xlane.f32.xlu0 %v242
  %v244 = vpop.xlane.xlu0 %243
  %v245 = vadd.f32 %v226, %v227
  %246 = vadd.xlane.f32.xlu0 %v245
  %v247 = vpop.xlane.xlu0 %246
  %v248 = vadd.f32 %v228, %v229
  %249 = vadd.xlane.f32.xlu0 %v248
  %v250 = vpop.xlane.xlu0 %249
  %v251 = vadd.f32 %v230, %v231
  %252 = vadd.xlane.f32.xlu0 %v251
  %v253 = vpop.xlane.xlu0 %252
  %v254 = vadd.f32 %v232, %v233
  %255 = vadd.xlane.f32.xlu0 %v254
  %v256 = vpop.xlane.xlu0 %255
  %v257 = vadd.f32 %v234, %v235
  %258 = vadd.xlane.f32.xlu0 %v257
  %v259 = vpop.xlane.xlu0 %258
  %v260 = vmul.f32 %v238, 0.005
  %v261 = vmul.f32 %v241, 0.005
  %v262 = vmul.f32 %v244, 0.005
  %v263 = vmul.f32 %v247, 0.005
  %v264 = vmul.f32 %v250, 0.005
  %v265 = vmul.f32 %v253, 0.005
  %v266 = vmul.f32 %v256, 0.005
  %v267 = vmul.f32 %v259, 0.005
  %v268 = vmul.f32 %v212, %v212
  %v269 = vmul.f32 %v213, %v213
  %v270 = vmul.f32 %v214, %v214
  %v271 = vmul.f32 %v215, %v215
  %v272 = vmul.f32 %v216, %v216
  %v273 = vmul.f32 %v217, %v217
  %v274 = vmul.f32 %v218, %v218
  %v275 = vmul.f32 %v219, %v219
  %v276 = vsub.f32 %v260, %v268
  %v277 = vsub.f32 %v261, %v269
  %v278 = vsub.f32 %v262, %v270
  %v279 = vsub.f32 %v263, %v271
  %v280 = vsub.f32 %v264, %v272
  %v281 = vsub.f32 %v265, %v273
  %v282 = vsub.f32 %v266, %v274
  %v283 = vsub.f32 %v267, %v275
  %v284 = vmax.f32 %v276, 0.0
  %v285 = vmax.f32 %v277, 0.0
  %v286 = vmax.f32 %v278, 0.0
  %v287 = vmax.f32 %v279, 0.0
  %v288 = vmax.f32 %v280, 0.0
  %v289 = vmax.f32 %v281, 0.0
  %v290 = vmax.f32 %v282, 0.0
  %v291 = vmax.f32 %v283, 0.0
  %v292 = vsub.f32 %v130, %v212
  %v293 = vsub.f32 %v132, %v212
  %v294 = vsub.f32 %v134, %v213
  %v295 = vsub.f32 %v136, %v213
  %v296 = vsub.f32 %v140, %v214
  %v297 = vsub.f32 %v142, %v214
  %v298 = vsub.f32 %v144, %v215
  %v299 = vsub.f32 %v146, %v215
  %v300 = vsub.f32 %v150, %v216
  %v301 = vsub.f32 %v152, %v216
  %v302 = vsub.f32 %v154, %v217
  %v303 = vsub.f32 %v156, %v217
  %v304 = vsub.f32 %v160, %v218
  %v305 = vsub.f32 %v162, %v218
  %v306 = vsub.f32 %v164, %v219
  %v307 = vsub.f32 %v166, %v219
  %v308 = vadd.f32 %v284, 1e-05
  %v309 = vadd.f32 %v285, 1e-05
  %v310 = vadd.f32 %v286, 1e-05
  %v311 = vadd.f32 %v287, 1e-05
  %v312 = vadd.f32 %v288, 1e-05
  %v313 = vadd.f32 %v289, 1e-05
  %v314 = vadd.f32 %v290, 1e-05
  %v315 = vadd.f32 %v291, 1e-05
  %v316 = vrsqrt.pop %v308
  %v317 = vrsqrt.pop %v309
  %v318 = vrsqrt.pop %v310
  %v319 = vrsqrt.pop %v311
  %v320 = vrsqrt.pop %v312
  %v321 = vrsqrt.pop %v313
  %v322 = vrsqrt.pop %v314
  %v323 = vrsqrt.pop %v315
  %v324 = vmul.f32 %v292, %v316
  %v325 = vmul.f32 %v293, %v316
  %v326 = vmul.f32 %v294, %v317
  %v327 = vmul.f32 %v295, %v317
  %v328 = vmul.f32 %v296, %v318
  %v329 = vmul.f32 %v297, %v318
  %v330 = vmul.f32 %v298, %v319
  %v331 = vmul.f32 %v299, %v319
  %v332 = vmul.f32 %v300, %v320
  %v333 = vmul.f32 %v301, %v320
  %v334 = vmul.f32 %v302, %v321
  %v335 = vmul.f32 %v303, %v321
  %v336 = vmul.f32 %v304, %v322
  %v337 = vmul.f32 %v305, %v322
  %v338 = vmul.f32 %v306, %v323
  %v339 = vmul.f32 %v307, %v323
  %v340 = vmax.f32 %v324, 0.0
  %v341 = vmax.f32 %v325, 0.0
  %v342 = vmax.f32 %v326, 0.0
  %v343 = vmax.f32 %v327, 0.0
  %v344 = vmax.f32 %v328, 0.0
  %v345 = vmax.f32 %v329, 0.0
  %v346 = vmax.f32 %v330, 0.0
  %v347 = vmax.f32 %v331, 0.0
  %v348 = vmax.f32 %v332, 0.0
  %v349 = vmax.f32 %v333, 0.0
  %v350 = vmax.f32 %v334, 0.0
  %v351 = vmax.f32 %v335, 0.0
  %v352 = vmax.f32 %v336, 0.0
  %v353 = vmax.f32 %v337, 0.0
  %v354 = vmax.f32 %v338, 0.0
  %v355 = vmax.f32 %v339, 0.0
  %v356 = vld [vmem:[%s2] sm:$0xf]
  %v357 = vld [vmem:[%s2 + $0x4] sm:$0xf]
  %v358 = vld [vmem:[%s2 + $0x8] sm:$0xf]
  %v359 = vld [vmem:[%s2 + $0xc] sm:$0xf]
  %v360 = vld [vmem:[%s2 + $0x10] sm:$0xf]
  %v361 = vld [vmem:[%s2 + $0x14] sm:$0xf]
  %v362 = vld [vmem:[%s2 + $0x18] sm:$0xf]
  %v363 = vld [vmem:[%s2 + $0x1c] sm:$0xf]
  %v364 = vpack.c.bf16 %v342, %v340
  %v365 = vpack.c.bf16 %v343, %v341
  %v366 = vpack.c.bf16 %v346, %v344
  %v367 = vpack.c.bf16 %v347, %v345
  %v368 = vpack.c.bf16 %v350, %v348
  %v369 = vpack.c.bf16 %v351, %v349
  %v370 = vpack.c.bf16 %v354, %v352
  %v371 = vpack.c.bf16 %v355, %v353
  %v380 = vunpack.c.l.b16 %v356
  %v381 = vunpack.c.l.b16 %v357
  %v382 = vunpack.c.l.b16 %v358
  %v383 = vunpack.c.l.b16 %v359
  %v384 = vunpack.c.l.b16 %v360
  %v385 = vunpack.c.l.b16 %v361
  %v386 = vunpack.c.l.b16 %v362
  %v387 = vunpack.c.l.b16 %v363
  %v388 = vpack.c.b16 %v381, %v380
  %v389 = vpack.c.b16 %v383, %v382
  %v390 = vpack.c.b16 %v385, %v384
  %v391 = vpack.c.b16 %v387, %v386
  %vm392 = vcmask 523264
  %v394 = vsel %vm392, %v388, 0
  %v397 = vsel %vm392, %v389, 0
  %v400 = vsel %vm392, %v390, 0
  %v403 = vsel %vm392, %v391, 0
  %405 = vmatprep.subr.bf16.mxu0 %v365
  %406 = vmatpush1.bf16.msra.mxu0 %v364
  %407 = vmatprep.subr.bf16.mxu0 %v367
  %408 = vmatpush1.bf16.msra.mxu0 %v366
  %409 = vmatprep.subr.bf16.mxu0 %v369
  %410 = vmatpush1.bf16.msra.mxu0 %v368
  %411 = vmatprep.subr.bf16.mxu0 %v371
  %412 = vmatpush1.bf16.msra.mxu0 %v370
  %413 = vmatprep.subr.bf16.mxu0 0
  %414 = vmatpush1.bf16.msra.mxu0 0
  %415 = vmatprep.subr.bf16.mxu0 0
  %416 = vmatpush1.bf16.msra.mxu0 0
  %417 = vmatprep.subr.bf16.mxu0 0
  %418 = vmatpush1.bf16.msra.mxu0 0
  %419 = vmatprep.subr.bf16.mxu0 0
  %420 = vmatpush1.bf16.msra.mxu0 0
  %421 = vmatprep.subr.bf16.mxu0 0
  %422 = vmatpush1.bf16.msra.mxu0 0
  %423 = vmatprep.subr.bf16.mxu0 0
  %424 = vmatpush1.bf16.msra.mxu0 0
  %425 = vmatprep.subr.bf16.mxu0 0
  %426 = vmatpush1.bf16.msra.mxu0 0
  %427 = vmatprep.subr.bf16.mxu0 0
  %428 = vmatpush1.bf16.msra.mxu0 0
  %429 = vmatprep.subr.bf16.mxu0 0
  %430 = vmatpush1.bf16.msra.mxu0 0
  %431 = vmatprep.subr.bf16.mxu0 0
  %432 = vmatpush1.bf16.msra.mxu0 0
  %433 = vmatprep.subr.bf16.mxu0 0
  %434 = vmatpush1.bf16.msra.mxu0 0
  %435 = vmatprep.subr.bf16.mxu0 0
  %436 = vmatpush1.bf16.msra.mxu0 0
  %437 = vmatprep.mubr.bf16.mxu0 0
  %438 = vmatmul.mubr.bf16.gmra.mrb[0].mxu0 %v394
  %v439 = vpop.f32.mrb[0].mxu0
  %v440 = vadd.f32 0.0, %v439
  %v441 = vpop.f32.mrb[0].mxu0
  %v442 = vadd.f32 0.0, %v441
  %v443 = vpop.f32.mrb[0].mxu0
  %v444 = vadd.f32 0.0, %v443
  %v445 = vpop.f32.mrb[0].mxu0
  %v446 = vadd.f32 0.0, %v445
  %447 = vmatprep.mubr.bf16.mxu0 0
  %448 = vmatmul.mubr.bf16.gmra.mrb[0].mxu0 %v397
  %v449 = vpop.f32.mrb[0].mxu0
  %v450 = vadd.f32 0.0, %v449
  %v451 = vpop.f32.mrb[0].mxu0
  %v452 = vadd.f32 0.0, %v451
  %v453 = vpop.f32.mrb[0].mxu0
  %v454 = vadd.f32 0.0, %v453
  %v455 = vpop.f32.mrb[0].mxu0
  %v456 = vadd.f32 0.0, %v455
  %457 = vmatprep.mubr.bf16.mxu0 0
  %458 = vmatmul.mubr.bf16.gmra.mrb[0].mxu0 %v400
  %v459 = vpop.f32.mrb[0].mxu0
  %v460 = vadd.f32 0.0, %v459
  %v461 = vpop.f32.mrb[0].mxu0
  %v462 = vadd.f32 0.0, %v461
  %v463 = vpop.f32.mrb[0].mxu0
  %v464 = vadd.f32 0.0, %v463
  %v465 = vpop.f32.mrb[0].mxu0
  %v466 = vadd.f32 0.0, %v465
  %467 = vmatprep.mubr.bf16.mxu0 0
  %468 = vmatmul.mubr.bf16.gmra.mrb[0].mxu0 %v403
  %v469 = vpop.f32.mrb[0].mxu0
  %v470 = vadd.f32 0.0, %v469
  %v471 = vpop.f32.mrb[0].mxu0
  %v472 = vadd.f32 0.0, %v471
  %v473 = vpop.f32.mrb[0].mxu0
  %v474 = vadd.f32 0.0, %v473
  %v475 = vpop.f32.mrb[0].mxu0
  %v476 = vadd.f32 0.0, %v475
  %477 = vdwg.mxu0
  %v478 = vsel %vm170, %v440, 0.0
  %v479 = vsel %vm171, %v442, 0.0
  %v480 = vsel %vm170, %v444, 0.0
  %v481 = vsel %vm171, %v446, 0.0
  %v482 = vsel %vm170, %v450, 0.0
  %v483 = vsel %vm171, %v452, 0.0
  %v484 = vsel %vm170, %v454, 0.0
  %v485 = vsel %vm171, %v456, 0.0
  %v486 = vsel %vm170, %v460, 0.0
  %v487 = vsel %vm171, %v462, 0.0
  %v488 = vsel %vm170, %v464, 0.0
  %v489 = vsel %vm171, %v466, 0.0
  %v490 = vsel %vm170, %v470, 0.0
  %v491 = vsel %vm171, %v472, 0.0
  %v492 = vsel %vm170, %v474, 0.0
  %v493 = vsel %vm171, %v476, 0.0
  %v494 = vadd.f32 %v478, %v479
  %495 = vadd.xlane.f32.xlu0 %v494
  %v496 = vpop.xlane.xlu0 %495
  %v497 = vadd.f32 %v480, %v481
  %498 = vadd.xlane.f32.xlu0 %v497
  %v499 = vpop.xlane.xlu0 %498
  %v500 = vadd.f32 %v482, %v483
  %501 = vadd.xlane.f32.xlu0 %v500
  %v502 = vpop.xlane.xlu0 %501
  %v503 = vadd.f32 %v484, %v485
  %504 = vadd.xlane.f32.xlu0 %v503
  %v505 = vpop.xlane.xlu0 %504
  %v506 = vadd.f32 %v486, %v487
  %507 = vadd.xlane.f32.xlu0 %v506
  %v508 = vpop.xlane.xlu0 %507
  %v509 = vadd.f32 %v488, %v489
  %510 = vadd.xlane.f32.xlu0 %v509
  %v511 = vpop.xlane.xlu0 %510
  %v512 = vadd.f32 %v490, %v491
  %513 = vadd.xlane.f32.xlu0 %v512
  %v514 = vpop.xlane.xlu0 %513
  %v515 = vadd.f32 %v492, %v493
  %516 = vadd.xlane.f32.xlu0 %v515
  %v517 = vpop.xlane.xlu0 %516
  %v518 = vmul.f32 %v496, 0.005
  %v519 = vmul.f32 %v499, 0.005
  %v520 = vmul.f32 %v502, 0.005
  %v521 = vmul.f32 %v505, 0.005
  %v522 = vmul.f32 %v508, 0.005
  %v523 = vmul.f32 %v511, 0.005
  %v524 = vmul.f32 %v514, 0.005
  %v525 = vmul.f32 %v517, 0.005
  %v526 = vmul.f32 %v478, %v478
  %v527 = vmul.f32 %v479, %v479
  %v528 = vmul.f32 %v480, %v480
  %v529 = vmul.f32 %v481, %v481
  %v530 = vmul.f32 %v482, %v482
  %v531 = vmul.f32 %v483, %v483
  %v532 = vmul.f32 %v484, %v484
  %v533 = vmul.f32 %v485, %v485
  %v534 = vmul.f32 %v486, %v486
  %v535 = vmul.f32 %v487, %v487
  %v536 = vmul.f32 %v488, %v488
  %v537 = vmul.f32 %v489, %v489
  %v538 = vmul.f32 %v490, %v490
  %v539 = vmul.f32 %v491, %v491
  %v540 = vmul.f32 %v492, %v492
  %v541 = vmul.f32 %v493, %v493
  %v542 = vadd.f32 %v526, %v527
  %543 = vadd.xlane.f32.xlu0 %v542
  %v544 = vpop.xlane.xlu0 %543
  %v545 = vadd.f32 %v528, %v529
  %546 = vadd.xlane.f32.xlu0 %v545
  %v547 = vpop.xlane.xlu0 %546
  %v548 = vadd.f32 %v530, %v531
  %549 = vadd.xlane.f32.xlu0 %v548
  %v550 = vpop.xlane.xlu0 %549
  %v551 = vadd.f32 %v532, %v533
  %552 = vadd.xlane.f32.xlu0 %v551
  %v553 = vpop.xlane.xlu0 %552
  %v554 = vadd.f32 %v534, %v535
  %555 = vadd.xlane.f32.xlu0 %v554
  %v556 = vpop.xlane.xlu0 %555
  %v557 = vadd.f32 %v536, %v537
  %558 = vadd.xlane.f32.xlu0 %v557
  %v559 = vpop.xlane.xlu0 %558
  %v560 = vadd.f32 %v538, %v539
  %561 = vadd.xlane.f32.xlu0 %v560
  %v562 = vpop.xlane.xlu0 %561
  %v563 = vadd.f32 %v540, %v541
  %564 = vadd.xlane.f32.xlu0 %v563
  %v565 = vpop.xlane.xlu0 %564
  %v566 = vmul.f32 %v544, 0.005
  %v567 = vmul.f32 %v547, 0.005
  %v568 = vmul.f32 %v550, 0.005
  %v569 = vmul.f32 %v553, 0.005
  %v570 = vmul.f32 %v556, 0.005
  %v571 = vmul.f32 %v559, 0.005
  %v572 = vmul.f32 %v562, 0.005
  %v573 = vmul.f32 %v565, 0.005
  %v574 = vmul.f32 %v518, %v518
  %v575 = vmul.f32 %v519, %v519
  %v576 = vmul.f32 %v520, %v520
  %v577 = vmul.f32 %v521, %v521
  %v578 = vmul.f32 %v522, %v522
  %v579 = vmul.f32 %v523, %v523
  %v580 = vmul.f32 %v524, %v524
  %v581 = vmul.f32 %v525, %v525
  %v582 = vsub.f32 %v566, %v574
  %v583 = vsub.f32 %v567, %v575
  %v584 = vsub.f32 %v568, %v576
  %v585 = vsub.f32 %v569, %v577
  %v586 = vsub.f32 %v570, %v578
  %v587 = vsub.f32 %v571, %v579
  %v588 = vsub.f32 %v572, %v580
  %v589 = vsub.f32 %v573, %v581
  %v590 = vmax.f32 %v582, 0.0
  %v591 = vmax.f32 %v583, 0.0
  %v592 = vmax.f32 %v584, 0.0
  %v593 = vmax.f32 %v585, 0.0
  %v594 = vmax.f32 %v586, 0.0
  %v595 = vmax.f32 %v587, 0.0
  %v596 = vmax.f32 %v588, 0.0
  %v597 = vmax.f32 %v589, 0.0
  %v598 = vsub.f32 %v440, %v518
  %v599 = vsub.f32 %v442, %v518
  %v600 = vsub.f32 %v444, %v519
  %v601 = vsub.f32 %v446, %v519
  %v602 = vsub.f32 %v450, %v520
  %v603 = vsub.f32 %v452, %v520
  %v604 = vsub.f32 %v454, %v521
  %v605 = vsub.f32 %v456, %v521
  %v606 = vsub.f32 %v460, %v522
  %v607 = vsub.f32 %v462, %v522
  %v608 = vsub.f32 %v464, %v523
  %v609 = vsub.f32 %v466, %v523
  %v610 = vsub.f32 %v470, %v524
  %v611 = vsub.f32 %v472, %v524
  %v612 = vsub.f32 %v474, %v525
  %v613 = vsub.f32 %v476, %v525
  %v614 = vadd.f32 %v590, 1e-05
  %v615 = vadd.f32 %v591, 1e-05
  %v616 = vadd.f32 %v592, 1e-05
  %v617 = vadd.f32 %v593, 1e-05
  %v618 = vadd.f32 %v594, 1e-05
  %v619 = vadd.f32 %v595, 1e-05
  %v620 = vadd.f32 %v596, 1e-05
  %v621 = vadd.f32 %v597, 1e-05
  %v622 = vrsqrt.pop %v614
  %v623 = vrsqrt.pop %v615
  %v624 = vrsqrt.pop %v616
  %v625 = vrsqrt.pop %v617
  %v626 = vrsqrt.pop %v618
  %v627 = vrsqrt.pop %v619
  %v628 = vrsqrt.pop %v620
  %v629 = vrsqrt.pop %v621
  %v630 = vmul.f32 %v598, %v622
  %v631 = vmul.f32 %v599, %v622
  %v632 = vmul.f32 %v600, %v623
  %v633 = vmul.f32 %v601, %v623
  %v634 = vmul.f32 %v602, %v624
  %v635 = vmul.f32 %v603, %v624
  %v636 = vmul.f32 %v604, %v625
  %v637 = vmul.f32 %v605, %v625
  %v638 = vmul.f32 %v606, %v626
  %v639 = vmul.f32 %v607, %v626
  %v640 = vmul.f32 %v608, %v627
  %v641 = vmul.f32 %v609, %v627
  %v642 = vmul.f32 %v610, %v628
  %v643 = vmul.f32 %v611, %v628
  %v644 = vmul.f32 %v612, %v629
  %v645 = vmul.f32 %v613, %v629
  %v646 = vmax.f32 %v630, 0.0
  %v647 = vmax.f32 %v631, 0.0
  %v648 = vmax.f32 %v632, 0.0
  %v649 = vmax.f32 %v633, 0.0
  %v650 = vmax.f32 %v634, 0.0
  %v651 = vmax.f32 %v635, 0.0
  %v652 = vmax.f32 %v636, 0.0
  %v653 = vmax.f32 %v637, 0.0
  %v654 = vmax.f32 %v638, 0.0
  %v655 = vmax.f32 %v639, 0.0
  %v656 = vmax.f32 %v640, 0.0
  %v657 = vmax.f32 %v641, 0.0
  %v658 = vmax.f32 %v642, 0.0
  %v659 = vmax.f32 %v643, 0.0
  %v660 = vmax.f32 %v644, 0.0
  %v661 = vmax.f32 %v645, 0.0
  %v662 = vld [vmem:[%s3] sm:$0xf]
  %v663 = vld [vmem:[%s3 + $0x4] sm:$0xf]
  %v664 = vld [vmem:[%s3 + $0x8] sm:$0xf]
  %v665 = vld [vmem:[%s3 + $0xc] sm:$0xf]
  %v666 = vld [vmem:[%s3 + $0x10] sm:$0xf]
  %v667 = vld [vmem:[%s3 + $0x14] sm:$0xf]
  %v668 = vld [vmem:[%s3 + $0x18] sm:$0xf]
  %v669 = vld [vmem:[%s3 + $0x1c] sm:$0xf]
  %v670 = vpack.c.bf16 %v648, %v646
  %v671 = vpack.c.bf16 %v649, %v647
  %v672 = vpack.c.bf16 %v652, %v650
  %v673 = vpack.c.bf16 %v653, %v651
  %v674 = vpack.c.bf16 %v656, %v654
  %v675 = vpack.c.bf16 %v657, %v655
  %v676 = vpack.c.bf16 %v660, %v658
  %v677 = vpack.c.bf16 %v661, %v659
  %v686 = vunpack.c.l.b16 %v662
  %v687 = vunpack.c.l.b16 %v663
  %v688 = vunpack.c.l.b16 %v664
  %v689 = vunpack.c.l.b16 %v665
  %v690 = vunpack.c.l.b16 %v666
  %v691 = vunpack.c.l.b16 %v667
  %v692 = vunpack.c.l.b16 %v668
  %v693 = vunpack.c.l.b16 %v669
  %v694 = vpack.c.b16 %v687, %v686
  %v695 = vpack.c.b16 %v689, %v688
  %v696 = vpack.c.b16 %v691, %v690
  %v697 = vpack.c.b16 %v693, %v692
  %v699 = vsel %vm392, %v694, 0
  %v702 = vsel %vm392, %v695, 0
  %v705 = vsel %vm392, %v696, 0
  %v708 = vsel %vm392, %v697, 0
  %710 = vmatprep.subr.bf16.mxu0 %v671
  %711 = vmatpush1.bf16.msra.mxu0 %v670
  %712 = vmatprep.subr.bf16.mxu0 %v673
  %713 = vmatpush1.bf16.msra.mxu0 %v672
  %714 = vmatprep.subr.bf16.mxu0 %v675
  %715 = vmatpush1.bf16.msra.mxu0 %v674
  %716 = vmatprep.subr.bf16.mxu0 %v677
  %717 = vmatpush1.bf16.msra.mxu0 %v676
  %718 = vmatprep.subr.bf16.mxu0 0
  %719 = vmatpush1.bf16.msra.mxu0 0
  %720 = vmatprep.subr.bf16.mxu0 0
  %721 = vmatpush1.bf16.msra.mxu0 0
  %722 = vmatprep.subr.bf16.mxu0 0
  %723 = vmatpush1.bf16.msra.mxu0 0
  %724 = vmatprep.subr.bf16.mxu0 0
  %725 = vmatpush1.bf16.msra.mxu0 0
  %726 = vmatprep.subr.bf16.mxu0 0
  %727 = vmatpush1.bf16.msra.mxu0 0
  %728 = vmatprep.subr.bf16.mxu0 0
  %729 = vmatpush1.bf16.msra.mxu0 0
  %730 = vmatprep.subr.bf16.mxu0 0
  %731 = vmatpush1.bf16.msra.mxu0 0
  %732 = vmatprep.subr.bf16.mxu0 0
  %733 = vmatpush1.bf16.msra.mxu0 0
  %734 = vmatprep.subr.bf16.mxu0 0
  %735 = vmatpush1.bf16.msra.mxu0 0
  %736 = vmatprep.subr.bf16.mxu0 0
  %737 = vmatpush1.bf16.msra.mxu0 0
  %738 = vmatprep.subr.bf16.mxu0 0
  %739 = vmatpush1.bf16.msra.mxu0 0
  %740 = vmatprep.subr.bf16.mxu0 0
  %741 = vmatpush1.bf16.msra.mxu0 0
  %742 = vmatprep.mubr.bf16.mxu0 0
  %743 = vmatmul.mubr.bf16.gmra.mrb[0].mxu0 %v699
  %v744 = vpop.f32.mrb[0].mxu0
  %v745 = vadd.f32 0.0, %v744
  %v746 = vpop.f32.mrb[0].mxu0
  %v747 = vadd.f32 0.0, %v746
  %v748 = vpop.f32.mrb[0].mxu0
  %v749 = vadd.f32 0.0, %v748
  %v750 = vpop.f32.mrb[0].mxu0
  %v751 = vadd.f32 0.0, %v750
  %752 = vmatprep.mubr.bf16.mxu0 0
  %753 = vmatmul.mubr.bf16.gmra.mrb[0].mxu0 %v702
  %v754 = vpop.f32.mrb[0].mxu0
  %v755 = vadd.f32 0.0, %v754
  %v756 = vpop.f32.mrb[0].mxu0
  %v757 = vadd.f32 0.0, %v756
  %v758 = vpop.f32.mrb[0].mxu0
  %v759 = vadd.f32 0.0, %v758
  %v760 = vpop.f32.mrb[0].mxu0
  %v761 = vadd.f32 0.0, %v760
  %762 = vmatprep.mubr.bf16.mxu0 0
  %763 = vmatmul.mubr.bf16.gmra.mrb[0].mxu0 %v705
  %v764 = vpop.f32.mrb[0].mxu0
  %v765 = vadd.f32 0.0, %v764
  %v766 = vpop.f32.mrb[0].mxu0
  %v767 = vadd.f32 0.0, %v766
  %v768 = vpop.f32.mrb[0].mxu0
  %v769 = vadd.f32 0.0, %v768
  %v770 = vpop.f32.mrb[0].mxu0
  %v771 = vadd.f32 0.0, %v770
  %772 = vmatprep.mubr.bf16.mxu0 0
  %773 = vmatmul.mubr.bf16.gmra.mrb[0].mxu0 %v708
  %v774 = vpop.f32.mrb[0].mxu0
  %v775 = vadd.f32 0.0, %v774
  %v776 = vpop.f32.mrb[0].mxu0
  %v777 = vadd.f32 0.0, %v776
  %v778 = vpop.f32.mrb[0].mxu0
  %v779 = vadd.f32 0.0, %v778
  %v780 = vpop.f32.mrb[0].mxu0
  %v781 = vadd.f32 0.0, %v780
  %782 = vdwg.mxu0
  %v783 = vsel %vm170, %v745, 0.0
  %v784 = vsel %vm171, %v747, 0.0
  %v785 = vsel %vm170, %v749, 0.0
  %v786 = vsel %vm171, %v751, 0.0
  %v787 = vsel %vm170, %v755, 0.0
  %v788 = vsel %vm171, %v757, 0.0
  %v789 = vsel %vm170, %v759, 0.0
  %v790 = vsel %vm171, %v761, 0.0
  %v791 = vsel %vm170, %v765, 0.0
  %v792 = vsel %vm171, %v767, 0.0
  %v793 = vsel %vm170, %v769, 0.0
  %v794 = vsel %vm171, %v771, 0.0
  %v795 = vsel %vm170, %v775, 0.0
  %v796 = vsel %vm171, %v777, 0.0
  %v797 = vsel %vm170, %v779, 0.0
  %v798 = vsel %vm171, %v781, 0.0
  %v799 = vadd.f32 %v783, %v784
  %800 = vadd.xlane.f32.xlu0 %v799
  %v801 = vpop.xlane.xlu0 %800
  %v802 = vadd.f32 %v785, %v786
  %803 = vadd.xlane.f32.xlu0 %v802
  %v804 = vpop.xlane.xlu0 %803
  %v805 = vadd.f32 %v787, %v788
  %806 = vadd.xlane.f32.xlu0 %v805
  %v807 = vpop.xlane.xlu0 %806
  %v808 = vadd.f32 %v789, %v790
  %809 = vadd.xlane.f32.xlu0 %v808
  %v810 = vpop.xlane.xlu0 %809
  %v811 = vadd.f32 %v791, %v792
  %812 = vadd.xlane.f32.xlu0 %v811
  %v813 = vpop.xlane.xlu0 %812
  %v814 = vadd.f32 %v793, %v794
  %815 = vadd.xlane.f32.xlu0 %v814
  %v816 = vpop.xlane.xlu0 %815
  %v817 = vadd.f32 %v795, %v796
  %818 = vadd.xlane.f32.xlu0 %v817
  %v819 = vpop.xlane.xlu0 %818
  %v820 = vadd.f32 %v797, %v798
  %821 = vadd.xlane.f32.xlu0 %v820
  %v822 = vpop.xlane.xlu0 %821
  %v823 = vmul.f32 %v801, 0.005
  %v824 = vmul.f32 %v804, 0.005
  %v825 = vmul.f32 %v807, 0.005
  %v826 = vmul.f32 %v810, 0.005
  %v827 = vmul.f32 %v813, 0.005
  %v828 = vmul.f32 %v816, 0.005
  %v829 = vmul.f32 %v819, 0.005
  %v830 = vmul.f32 %v822, 0.005
  %v831 = vmul.f32 %v783, %v783
  %v832 = vmul.f32 %v784, %v784
  %v833 = vmul.f32 %v785, %v785
  %v834 = vmul.f32 %v786, %v786
  %v835 = vmul.f32 %v787, %v787
  %v836 = vmul.f32 %v788, %v788
  %v837 = vmul.f32 %v789, %v789
  %v838 = vmul.f32 %v790, %v790
  %v839 = vmul.f32 %v791, %v791
  %v840 = vmul.f32 %v792, %v792
  %v841 = vmul.f32 %v793, %v793
  %v842 = vmul.f32 %v794, %v794
  %v843 = vmul.f32 %v795, %v795
  %v844 = vmul.f32 %v796, %v796
  %v845 = vmul.f32 %v797, %v797
  %v846 = vmul.f32 %v798, %v798
  %v847 = vadd.f32 %v831, %v832
  %848 = vadd.xlane.f32.xlu0 %v847
  %v849 = vpop.xlane.xlu0 %848
  %v850 = vadd.f32 %v833, %v834
  %851 = vadd.xlane.f32.xlu0 %v850
  %v852 = vpop.xlane.xlu0 %851
  %v853 = vadd.f32 %v835, %v836
  %854 = vadd.xlane.f32.xlu0 %v853
  %v855 = vpop.xlane.xlu0 %854
  %v856 = vadd.f32 %v837, %v838
  %857 = vadd.xlane.f32.xlu0 %v856
  %v858 = vpop.xlane.xlu0 %857
  %v859 = vadd.f32 %v839, %v840
  %860 = vadd.xlane.f32.xlu0 %v859
  %v861 = vpop.xlane.xlu0 %860
  %v862 = vadd.f32 %v841, %v842
  %863 = vadd.xlane.f32.xlu0 %v862
  %v864 = vpop.xlane.xlu0 %863
  %v865 = vadd.f32 %v843, %v844
  %866 = vadd.xlane.f32.xlu0 %v865
  %v867 = vpop.xlane.xlu0 %866
  %v868 = vadd.f32 %v845, %v846
  %869 = vadd.xlane.f32.xlu0 %v868
  %v870 = vpop.xlane.xlu0 %869
  %v871 = vmul.f32 %v849, 0.005
  %v872 = vmul.f32 %v852, 0.005
  %v873 = vmul.f32 %v855, 0.005
  %v874 = vmul.f32 %v858, 0.005
  %v875 = vmul.f32 %v861, 0.005
  %v876 = vmul.f32 %v864, 0.005
  %v877 = vmul.f32 %v867, 0.005
  %v878 = vmul.f32 %v870, 0.005
  %v879 = vmul.f32 %v823, %v823
  %v880 = vmul.f32 %v824, %v824
  %v881 = vmul.f32 %v825, %v825
  %v882 = vmul.f32 %v826, %v826
  %v883 = vmul.f32 %v827, %v827
  %v884 = vmul.f32 %v828, %v828
  %v885 = vmul.f32 %v829, %v829
  %v886 = vmul.f32 %v830, %v830
  %v887 = vsub.f32 %v871, %v879
  %v888 = vsub.f32 %v872, %v880
  %v889 = vsub.f32 %v873, %v881
  %v890 = vsub.f32 %v874, %v882
  %v891 = vsub.f32 %v875, %v883
  %v892 = vsub.f32 %v876, %v884
  %v893 = vsub.f32 %v877, %v885
  %v894 = vsub.f32 %v878, %v886
  %v895 = vmax.f32 %v887, 0.0
  %v896 = vmax.f32 %v888, 0.0
  %v897 = vmax.f32 %v889, 0.0
  %v898 = vmax.f32 %v890, 0.0
  %v899 = vmax.f32 %v891, 0.0
  %v900 = vmax.f32 %v892, 0.0
  %v901 = vmax.f32 %v893, 0.0
  %v902 = vmax.f32 %v894, 0.0
  %v903 = vsub.f32 %v745, %v823
  %v904 = vsub.f32 %v747, %v823
  %v905 = vsub.f32 %v749, %v824
  %v906 = vsub.f32 %v751, %v824
  %v907 = vsub.f32 %v755, %v825
  %v908 = vsub.f32 %v757, %v825
  %v909 = vsub.f32 %v759, %v826
  %v910 = vsub.f32 %v761, %v826
  %v911 = vsub.f32 %v765, %v827
  %v912 = vsub.f32 %v767, %v827
  %v913 = vsub.f32 %v769, %v828
  %v914 = vsub.f32 %v771, %v828
  %v915 = vsub.f32 %v775, %v829
  %v916 = vsub.f32 %v777, %v829
  %v917 = vsub.f32 %v779, %v830
  %v918 = vsub.f32 %v781, %v830
  %v919 = vadd.f32 %v895, 1e-05
  %v920 = vadd.f32 %v896, 1e-05
  %v921 = vadd.f32 %v897, 1e-05
  %v922 = vadd.f32 %v898, 1e-05
  %v923 = vadd.f32 %v899, 1e-05
  %v924 = vadd.f32 %v900, 1e-05
  %v925 = vadd.f32 %v901, 1e-05
  %v926 = vadd.f32 %v902, 1e-05
  %v927 = vrsqrt.pop %v919
  %v928 = vrsqrt.pop %v920
  %v929 = vrsqrt.pop %v921
  %v930 = vrsqrt.pop %v922
  %v931 = vrsqrt.pop %v923
  %v932 = vrsqrt.pop %v924
  %v933 = vrsqrt.pop %v925
  %v934 = vrsqrt.pop %v926
  %v935 = vmul.f32 %v903, %v927
  %v936 = vmul.f32 %v904, %v927
  %v937 = vmul.f32 %v905, %v928
  %v938 = vmul.f32 %v906, %v928
  %v939 = vmul.f32 %v907, %v929
  %v940 = vmul.f32 %v908, %v929
  %v941 = vmul.f32 %v909, %v930
  %v942 = vmul.f32 %v910, %v930
  %v943 = vmul.f32 %v911, %v931
  %v944 = vmul.f32 %v912, %v931
  %v945 = vmul.f32 %v913, %v932
  %v946 = vmul.f32 %v914, %v932
  %v947 = vmul.f32 %v915, %v933
  %v948 = vmul.f32 %v916, %v933
  %v949 = vmul.f32 %v917, %v934
  %v950 = vmul.f32 %v918, %v934
  %v951 = vmax.f32 %v935, 0.0
  %v952 = vmax.f32 %v936, 0.0
  %v953 = vmax.f32 %v937, 0.0
  %v954 = vmax.f32 %v938, 0.0
  %v955 = vmax.f32 %v939, 0.0
  %v956 = vmax.f32 %v940, 0.0
  %v957 = vmax.f32 %v941, 0.0
  %v958 = vmax.f32 %v942, 0.0
  %v959 = vmax.f32 %v943, 0.0
  %v960 = vmax.f32 %v944, 0.0
  %v961 = vmax.f32 %v945, 0.0
  %v962 = vmax.f32 %v946, 0.0
  %v963 = vmax.f32 %v947, 0.0
  %v964 = vmax.f32 %v948, 0.0
  %v965 = vmax.f32 %v949, 0.0
  %v966 = vmax.f32 %v950, 0.0
  %v967 = vld [vmem:[%s4] sm:$0x1]
  %v968 = vpack.c.bf16 %v953, %v951
  %v969 = vpack.c.bf16 %v954, %v952
  %v970 = vpack.c.bf16 %v957, %v955
  %v971 = vpack.c.bf16 %v958, %v956
  %v972 = vpack.c.bf16 %v961, %v959
  %v973 = vpack.c.bf16 %v962, %v960
  %v974 = vpack.c.bf16 %v965, %v963
  %v975 = vpack.c.bf16 %v966, %v964
  %v976 = vld [vmem:[%s5] sm:$0x3]
  %978 = vset.pattern.permute.xlu0 0
  %979 = vperm.xlu0 %978, %v976
  %v980 = vpop.permute.xlu0 %979
  %v983 = vsel %vm392, %v967, 0
  %985 = vmatprep.subr.bf16.mxu0 %v969
  %986 = vmatpush1.bf16.msra.mxu0 %v968
  %987 = vmatprep.subr.bf16.mxu0 %v971
  %988 = vmatpush1.bf16.msra.mxu0 %v970
  %989 = vmatprep.subr.bf16.mxu0 %v973
  %990 = vmatpush1.bf16.msra.mxu0 %v972
  %991 = vmatprep.subr.bf16.mxu0 %v975
  %992 = vmatpush1.bf16.msra.mxu0 %v974
  %993 = vmatprep.subr.bf16.mxu0 0
  %994 = vmatpush1.bf16.msra.mxu0 0
  %995 = vmatprep.subr.bf16.mxu0 0
  %996 = vmatpush1.bf16.msra.mxu0 0
  %997 = vmatprep.subr.bf16.mxu0 0
  %998 = vmatpush1.bf16.msra.mxu0 0
  %999 = vmatprep.subr.bf16.mxu0 0
  %1000 = vmatpush1.bf16.msra.mxu0 0
  %1001 = vmatprep.subr.bf16.mxu0 0
  %1002 = vmatpush1.bf16.msra.mxu0 0
  %1003 = vmatprep.subr.bf16.mxu0 0
  %1004 = vmatpush1.bf16.msra.mxu0 0
  %1005 = vmatprep.subr.bf16.mxu0 0
  %1006 = vmatpush1.bf16.msra.mxu0 0
  %1007 = vmatprep.subr.bf16.mxu0 0
  %1008 = vmatpush1.bf16.msra.mxu0 0
  %1009 = vmatprep.subr.bf16.mxu0 0
  %1010 = vmatpush1.bf16.msra.mxu0 0
  %1011 = vmatprep.subr.bf16.mxu0 0
  %1012 = vmatpush1.bf16.msra.mxu0 0
  %1013 = vmatprep.subr.bf16.mxu0 0
  %1014 = vmatpush1.bf16.msra.mxu0 0
  %1015 = vmatprep.subr.bf16.mxu0 0
  %1016 = vmatpush1.bf16.msra.mxu0 0
  %1017 = vmatprep.mubr.bf16.mxu0 0
  %1018 = vmatmul.mubr.bf16.gmra.mrb[0].mxu0 %v983
  %v1019 = vpop.f32.mrb[0].mxu0
  %v1020 = vadd.f32 %v980, %v1019
  %v1021 = vpop.f32.mrb[0].mxu0
  %v1022 = vadd.f32 %v980, %v1021
  %v1023 = vpop.f32.mrb[0].mxu0
  %v1024 = vpop.f32.mrb[0].mxu0
  %1025 = vdwg.mxu0
  %v1028 = vcombine.low %v1020, %v1022
  %v1030 = vunpack.c.l.s4 1983009808
  %v1031 = vunpack.c.0.s8 %v1030
  %v1032 = vlaneseq
  %v1033 = vshrl.u32 %v1032, 7
  %v1034 = vsub.s32 %v1031, %v1033
  %v1035 = vrot.slane %v1028, %v1034
  %1037 = vst [vmem:[%s6] sm:$0xf] %v1035
  // Predicated region
  $region26: #{mlp_forward.1} parent=0 // pred_check
    _
  $region27: #{mlp_forward.1} parent=0 // pred_check_branch
    %1039 = sbr.rel (0) target = $region29
  $region28: #{mlp_forward.1} parent=0 // pred_region
    _
  $region29: #{mlp_forward.1} parent=0 // pred_fallthru
    _
  // Predicated region
  $region30: #{mlp_forward.1} parent=0 // pred_check
    _
  $region31: #{mlp_forward.1} parent=0 // pred_check_branch
    %1041 = sbr.rel (0) target = $region33
  $region32: #{mlp_forward.1} parent=0 // pred_region
    _
  $region33: #{mlp_forward.1} parent=0 // pred_fallthru
    _

</llo_original>
